<compile_context>
chip_gen: v7x
topology: tpu7x:2x2x1
jax: 0.10.0
libtpu: 0.0.40
codegen_flags: <defaults>
</compile_context>

<pallas_src>
import numpy as np

import jax
import jax.numpy as jnp
from jax.experimental import pallas as pl
from jax.experimental.pallas import tpu as pltpu


# ----------------------------- Pallas kernels ------------------------------ #

def _predict_kernel(a_ref, i_ref, w1_ref, bw_ref, b2_ref, o_ref):
    # a_ref, i_ref: (TB, D); w1: (D, 8); bw: (2, 8) = [b1; w2]; b2: (1, 1) SMEM.
    x = a_ref[...] * i_ref[...]                                        # VPU, (TB, D)
    h = jnp.dot(x, w1_ref[...], preferred_element_type=jnp.float32) + bw_ref[0:1, :]
    h = jnp.maximum(h, 0.0)                    # ReLU; Dropout(p=0.0) is identity
    # Second Linear (8 -> 1) on the VPU: broadcast-mul + 8-wide reduce.
    y = jnp.sum(h * bw_ref[1:2, :], axis=-1) + b2_ref[0, 0]            # (TB,)
    o_ref[...] = jax.nn.sigmoid(y)[None, :]                            # lane-dense (1, TB)


def _group_predict_kernel(umem_ref, wgt_ref, i_ref, w1_ref, bw_ref, b2_ref, o_ref):
    # umem: (M, TB, D) gathered member embeddings; wgt: (M, TB) with 1/|G|
    # weights (0.0 on padded member slots), so the weighted sum IS the group
    # mean.  Single reduce over the member axis (no serial VALU add chain).
    g = jnp.sum(umem_ref[...] * wgt_ref[...][:, :, None], axis=0)      # (TB, D)
    x = g * i_ref[...]
    h = jnp.dot(x, w1_ref[...], preferred_element_type=jnp.float32) + bw_ref[0:1, :]
    h = jnp.maximum(h, 0.0)
    y = jnp.sum(h * bw_ref[1:2, :], axis=-1) + b2_ref[0, 0]
    o_ref[...] = jax.nn.sigmoid(y)[None, :]


# ------------------------------ call wrappers ------------------------------ #

_VMEM_LIMIT = 32 << 20   # explicit scoped-VMEM limit: > v5e 16 MiB default, <= v7x 64 MiB physical
_TILE_BUDGET = 24 << 20  # bytes of double-buffered tile data; headroom for weights/out under the limit


def _round_up(x, m):
    return ((x + m - 1) // m) * m


def _tile_rows(b, row_words, cap):
    """Pick a 128-multiple batch tile.

    row_words: f32 words of VMEM needed per batch row per pipeline buffer
    (lane-padded).  The tile is (a) budget-limited with double buffering,
    (b) capped, and (c) limited to ceil(B/2) rounded up to 128 so that, when B
    is large, the grid has >= 2 steps and the "parallel" batch axis can be
    split across v7x's two TensorCores.
    """
    vmem_rows = max(128, (_TILE_BUDGET // (2 * 4 * row_words)) // 128 * 128)
    split2 = _round_up(max(-(-b // 2), 1), 128)
    return max(128, min(cap, vmem_rows, split2))


def _pad_axis(x, axis, size):
    if x.shape[axis] == size:
        return x
    pad = [(0, 0)] * x.ndim
    pad[axis] = (0, size - x.shape[axis])
    return jnp.pad(x, pad)


_SMEM_SPEC = pl.BlockSpec(memory_space=pltpu.MemorySpace.SMEM)


def _weight_specs(d):
    # Constant block indices -> weights stay resident, no per-step re-DMA.
    return [
        pl.BlockSpec((d, 8), lambda i: (0, 0)),   # W1
        pl.BlockSpec((2, 8), lambda i: (0, 0)),   # packed [b1; w2]
        _SMEM_SPEC,                               # b2 scalar in SMEM
    ]


def _compiler_params():
    return pltpu.CompilerParams(dimension_semantics=("parallel",),
                                vmem_limit_bytes=_VMEM_LIMIT)


def _call_predict(a_emb, i_emb, w1, bw, b2):
    b, d = a_emb.shape
    dv = _round_up(d, 128)                        # lane-padded VMEM width per row
    tb = _tile_rows(b, row_words=2 * dv + 8, cap=2048)
    b_pad = _round_up(b, tb)
    nb = b_pad // tb
    out = pl.pallas_call(
        _predict_kernel,
        out_shape=jax.ShapeDtypeStruct((1, b_pad), jnp.float32),
        grid=(nb,),
        in_specs=[pl.BlockSpec((tb, d), lambda i: (i, 0)),
                  pl.BlockSpec((tb, d), lambda i: (i, 0))] + _weight_specs(d),
        out_specs=pl.BlockSpec((1, tb), lambda i: (0, i)),
        compiler_params=_compiler_params(),
    )(_pad_axis(a_emb, 0, b_pad), _pad_axis(i_emb, 0, b_pad), w1, bw, b2)
    return out[0, :b].reshape(b, 1)


def _call_group_predict(u_mem, wgt, i_emb, w1, bw, b2):
    # u_mem: (M, B, D), wgt: (M, B), i_emb: (B, D)
    m, b, d = u_mem.shape
    dv = _round_up(d, 128)
    row_words = (m + 1) * dv + _round_up(m, 8) + 8   # umem + i_emb + wgt + out per row
    tb = _tile_rows(b, row_words=row_words, cap=1024)
    b_pad = _round_up(b, tb)
    nb = b_pad // tb
    out = pl.pallas_call(
        _group_predict_kernel,
        out_shape=jax.ShapeDtypeStruct((1, b_pad), jnp.float32),
        grid=(nb,),
        in_specs=[pl.BlockSpec((m, tb, d), lambda i: (0, i, 0)),
                  pl.BlockSpec((m, tb), lambda i: (0, i)),
                  pl.BlockSpec((tb, d), lambda i: (i, 0))] + _weight_specs(d),
        out_specs=pl.BlockSpec((1, tb), lambda i: (0, i)),
        compiler_params=_compiler_params(),
    )(_pad_axis(u_mem, 1, b_pad), _pad_axis(wgt, 1, b_pad),
      _pad_axis(i_emb, 0, b_pad), w1, bw, b2)
    return out[0, :b].reshape(b, 1)


# ------------------------------- ConsRec model ----------------------------- #

class ConsRecPallas:
    def __init__(self, num_users, num_items, num_groups, emb_dim,
                 group_number_dict, key):
        self.num_users = num_users
        self.num_items = num_items
        self.num_groups = num_groups
        self.emb_dim = emb_dim
        self.group_number_dict = group_number_dict

        k_u, k_i, k_w1, k_b1, k_w2, k_b2 = jax.random.split(key, 6)

        def xavier_uniform(k, shape):
            fan_in, fan_out = shape
            limit = float(np.sqrt(6.0 / (fan_in + fan_out)))
            return jax.random.uniform(k, shape, jnp.float32, -limit, limit)

        # nn.Embedding weights, xavier_uniform_ init, stored at NATIVE emb_dim
        # (no lane padding -> 2-4x less HBM traffic for every gather / tile).
        self.user_embedding = xavier_uniform(k_u, (num_users, emb_dim))
        self.item_embedding = xavier_uniform(k_i, (num_items, emb_dim))

        # PredictLayer: Linear(emb_dim, 8) -> ReLU -> Dropout(0) -> Linear(8, 1)
        lim1 = 1.0 / float(np.sqrt(emb_dim))
        self.w1 = jax.random.uniform(k_w1, (emb_dim, 8), jnp.float32, -lim1, lim1)
        self.b1 = jax.random.uniform(k_b1, (1, 8), jnp.float32, -lim1, lim1)
        lim2 = 1.0 / float(np.sqrt(8.0))
        self.w2 = jax.random.uniform(k_w2, (8, 1), jnp.float32, -lim2, lim2)
        self.b2 = jax.random.uniform(k_b2, (1, 1), jnp.float32, -lim2, lim2)
        # Pack the two tiny pinned operands into one (2, 8) block.
        self.bw = jnp.concatenate([self.b1, self.w2.reshape(1, 8)], axis=0)

        # Static padded member-id / weight table: replaces the per-call Python
        # dict walk and the dense (B, num_users) aggregation matmul.
        sizes = [len(v) for v in group_number_dict.values()] or [1]
        max_m = max(1, max(sizes))
        members = np.zeros((num_groups, max_m), np.int32)
        weights = np.zeros((num_groups, max_m), np.float32)
        for gid, mem in group_number_dict.items():
            n = len(mem)
            if n == 0:           # empty group -> zero embedding (torch would NaN)
                continue
            for j, uid in enumerate(mem):
                members[gid, j] = uid
                weights[gid, j] = 1.0 / n
        self.group_members = jnp.asarray(members)        # (num_groups, M)
        self.group_member_wgt = jnp.asarray(weights)     # (num_groups, M)

    # ---- forward dispatch, mirroring the torch module ----
    def forward(self, group_inputs, user_inputs, item_inputs):
        if group_inputs is not None and user_inputs is None:
            return self.group_forward(group_inputs, item_inputs)
        else:
            return self.user_forward(user_inputs, item_inputs)

    def user_forward(self, user_inputs, item_inputs):
        u_emb = jnp.take(self.user_embedding, user_inputs, axis=0)   # (B, D)
        i_emb = jnp.take(self.item_embedding, item_inputs, axis=0)   # (B, D)
        return _call_predict(u_emb, i_emb, self.w1, self.bw, self.b2)

    def group_forward(self, group_inputs, item_inputs):
        i_emb = jnp.take(self.item_embedding, item_inputs, axis=0)       # (B, D)
        mem_ids = jnp.take(self.group_members, group_inputs, axis=0)     # (B, M)
        wgt = jnp.take(self.group_member_wgt, group_inputs, axis=0)      # (B, M)
        # (M, B, D) layout keeps the dense (TB, D) in the block's trailing dims,
        # so the umem VMEM buffer is exactly M*TB*D words (no M->8 sublane pad).
        u_mem = jnp.take(self.user_embedding, mem_ids.T, axis=0)         # (M, B, D)
        return _call_group_predict(u_mem, wgt.T, i_emb, self.w1, self.bw, self.b2)


# ----------------------------------- demo ---------------------------------- #

if __name__ == "__main__":
    num_users, num_items, num_groups = 16, 20, 6
    emb_dim = 32
    batch = 8

    group_number_dict = {
        0: [0, 1, 2],
        1: [3, 4],
        2: [5, 6, 7, 8],
        3: [9, 10],
        4: [11, 12, 13],
        5: [14, 15],
    }

    key = jax.random.PRNGKey(0)
    k_model, k_u, k_i, k_g = jax.random.split(key, 4)

    model = ConsRecPallas(num_users, num_items, num_groups, emb_dim,
                          group_number_dict, k_model)

    user_inputs = jax.random.randint(k_u, (batch,), 0, num_users, jnp.int32)
    item_inputs = jax.random.randint(k_i, (batch,), 0, num_items, jnp.int32)
    group_inputs = jax.random.randint(k_g, (batch,), 0, num_groups, jnp.int32)

    # user path
    out_user = model.forward(None, user_inputs, item_inputs)
    out_user = jax.block_until_ready(out_user)
    assert out_user.shape == (batch, 1)
    assert bool(jnp.all((out_user >= 0.0) & (out_user <= 1.0)))

    # group path
    out_group = model.forward(group_inputs, None, item_inputs)
    out_group = jax.block_until_ready(out_group)
    assert out_group.shape == (batch, 1)
    assert bool(jnp.all((out_group >= 0.0) & (out_group <= 1.0)))

    # pure-JAX reference: user path
    u_emb = jnp.take(model.user_embedding, user_inputs, axis=0)
    i_emb = jnp.take(model.item_embedding, item_inputs, axis=0)
    ref_user = jax.nn.sigmoid(
        jnp.maximum((u_emb * i_emb) @ model.w1 + model.b1, 0.0) @ model.w2 + model.b2)
    assert jnp.allclose(out_user, ref_user, atol=1e-5, rtol=1e-5)

    # pure-JAX reference: group path (explicit per-group mean, as in the torch loop)
    g_rows = []
    for g in [int(x) for x in group_inputs]:
        mem = jnp.asarray(group_number_dict[g], jnp.int32)
        g_rows.append(jnp.mean(jnp.take(model.user_embedding, mem, axis=0), axis=0))
    g_emb_ref = jnp.stack(g_rows, axis=0)
    ref_group = jax.nn.sigmoid(
        jnp.maximum((g_emb_ref * i_emb) @ model.w1 + model.b1, 0.0) @ model.w2 + model.b2)
    assert jnp.allclose(out_group, ref_group, atol=1e-5, rtol=1e-5)

    print("KERNEL_OK")
</pallas_src>

<mosaic_0001>
module attributes {stable_mosaic.version = 11 : i64} {
  func.func @_predict_kernel(%arg0: i32, %arg1: memref<128x32xf32, #tpu.memory_space<vmem>>, %arg2: memref<128x32xf32, #tpu.memory_space<vmem>>, %arg3: memref<32x8xf32, #tpu.memory_space<vmem>>, %arg4: memref<2x8xf32, #tpu.memory_space<vmem>>, %arg5: memref<1x1xf32, #tpu.memory_space<smem>>, %arg6: memref<1x128xf32, #tpu.memory_space<vmem>>) attributes {dimension_semantics = [#tpu.dimension_semantics<parallel>], iteration_bounds = array<i64: 1>, scalar_prefetch = 0 : i64, scratch_operands = 0 : i64, tpu.core_type = #tpu.core_type<tc>, window_params = [{transform_indices = @transform_0, window_bounds = array<i64: 128, 32>}, {transform_indices = @transform_1, window_bounds = array<i64: 128, 32>}, {pipeline_mode = #tpu.pipeline_mode<synchronous>, transform_indices = @transform_2, window_bounds = array<i64: 32, 8>}, {pipeline_mode = #tpu.pipeline_mode<synchronous>, transform_indices = @transform_3, window_bounds = array<i64: 2, 8>}, {transform_indices = @transform_4, window_bounds = array<i64: 1, 1>}, {transform_indices = @transform_5, window_bounds = array<i64: 1, 128>}]} {
    %c0 = arith.constant 0 : index
    %c0_0 = arith.constant 0 : index
    %0 = vector.load %arg1[%c0, %c0_0] : memref<128x32xf32, #tpu.memory_space<vmem>>, vector<128x32xf32>
    %c0_1 = arith.constant 0 : index
    %c0_2 = arith.constant 0 : index
    %1 = vector.load %arg2[%c0_1, %c0_2] : memref<128x32xf32, #tpu.memory_space<vmem>>, vector<128x32xf32>
    %2 = arith.mulf %0, %1 : vector<128x32xf32>
    %c0_3 = arith.constant 0 : index
    %c0_4 = arith.constant 0 : index
    %3 = vector.load %arg3[%c0_3, %c0_4] : memref<32x8xf32, #tpu.memory_space<vmem>>, vector<32x8xf32>
    %cst = arith.constant dense<0.000000e+00> : vector<128x8xf32>
    %4 = tpu.matmul %2, %3, %cst {dimension_numbers = #tpu.dot_dimension_numbers<[1], [0], [0], [1], [0, 0, 1, 1], [], []>} : vector<128x32xf32>, vector<32x8xf32>, vector<128x8xf32> -> vector<128x8xf32>
    %c0_5 = arith.constant 0 : index
    %c0_6 = arith.constant 0 : index
    %5 = vector.load %arg4[%c0_5, %c0_6] : memref<2x8xf32, #tpu.memory_space<vmem>>, vector<1x8xf32>
    %6 = vector.broadcast %5 : vector<1x8xf32> to vector<128x8xf32>
    %7 = arith.addf %4, %6 : vector<128x8xf32>
    %cst_7 = arith.constant 0.000000e+00 : f32
    %8 = vector.broadcast %cst_7 : f32 to vector<128x8xf32>
    %9 = arith.maximumf %7, %8 : vector<128x8xf32>
    %c1 = arith.constant 1 : index
    %c0_8 = arith.constant 0 : index
    %10 = vector.load %arg4[%c1, %c0_8] : memref<2x8xf32, #tpu.memory_space<vmem>>, vector<1x8xf32>
    %11 = vector.broadcast %10 : vector<1x8xf32> to vector<128x8xf32>
    %12 = arith.mulf %9, %11 : vector<128x8xf32>
    %cst_9 = arith.constant dense<0.000000e+00> : vector<128xf32>
    %13 = vector.multi_reduction <add>, %12, %cst_9 [1] : vector<128x8xf32> to vector<128xf32>
    %c0_10 = arith.constant 0 : index
    %c0_11 = arith.constant 0 : index
    %14 = memref.load %arg5[%c0_10, %c0_11] : memref<1x1xf32, #tpu.memory_space<smem>>
    %15 = vector.broadcast %14 : f32 to vector<128xf32>
    %16 = arith.addf %13, %15 : vector<128xf32>
    %17 = arith.negf %16 : vector<128xf32>
    %18 = math.exp %17 : vector<128xf32>
    %cst_12 = arith.constant 1.000000e+00 : f32
    %19 = vector.broadcast %cst_12 : f32 to vector<128xf32>
    %20 = arith.addf %19, %18 : vector<128xf32>
    %21 = arith.divf %19, %20 : vector<128xf32>
    %22 = vector.shape_cast %21 : vector<128xf32> to vector<1x128xf32>
    %c0_13 = arith.constant 0 : index
    %c0_14 = arith.constant 0 : index
    %23 = vector.load %arg6[%c0_13, %c0_14] : memref<1x128xf32, #tpu.memory_space<vmem>>, vector<1x128xf32>
    tpu.vector_store %arg6[%c0_13, %c0_14], %22 {strides = array<i32>} : memref<1x128xf32, #tpu.memory_space<vmem>>, vector<1x128xf32>,
    return
  }
  func.func @transform_0(%arg0: i32) -> (i32, i32) {
    %c0_i32 = arith.constant 0 : i32
    %c0_i32_0 = arith.constant 0 : i32
    return %arg0, %c0_i32 : i32, i32
  }
  func.func @transform_1(%arg0: i32) -> (i32, i32) {
    %c0_i32 = arith.constant 0 : i32
    %c0_i32_0 = arith.constant 0 : i32
    return %arg0, %c0_i32 : i32, i32
  }
  func.func @transform_2(%arg0: i32) -> (i32, i32) {
    %c0_i32 = arith.constant 0 : i32
    %c0_i32_0 = arith.constant 0 : i32
    %c0_i32_1 = arith.constant 0 : i32
    return %c0_i32, %c0_i32_0 : i32, i32
  }
  func.func @transform_3(%arg0: i32) -> (i32, i32) {
    %c0_i32 = arith.constant 0 : i32
    %c0_i32_0 = arith.constant 0 : i32
    %c0_i32_1 = arith.constant 0 : i32
    return %c0_i32, %c0_i32_0 : i32, i32
  }
  func.func @transform_4(%arg0: i32) -> (i32, i32) {
    %c0_i32 = arith.constant 0 : i32
    %c0_i32_0 = arith.constant 0 : i32
    %c0_i32_1 = arith.constant 0 : i32
    return %c0_i32, %c0_i32_0 : i32, i32
  }
  func.func @transform_5(%arg0: i32) -> (i32, i32) {
    %c0_i32 = arith.constant 0 : i32
    %c0_i32_0 = arith.constant 0 : i32
    return %c0_i32, %arg0 : i32, i32
  }
}

</mosaic_0001>

<llo_original>
// kernel: tpu_custom_call.1
$region0: #{tpu_custom_call.1}
  #allocation0 [shape = 'u32[]', space=smem, size = 0x4, offset = 0x4, fixed_abs, tag = 'smem constant byte address 0x4 - core index']
  #allocation1 [shape = 'u32[144,128]{1,0:T(1,128)}', space=vmem, size = 0x12000, scoped, tag = 'internal scratch']
  #allocation2 [shape = 'f32[1,1]{1,0:T(1,128)S(6)}', space=smem, size = 0x200, scoped, tag = 'scoped memory for tpu_custom_call.1']
  %s0 = inlined_call_operand.vmem [shape: f32[128,32], index: 0, kind: input, shape index: {}]
  %s1 = inlined_call_operand.vmem [shape: f32[128,32], index: 1, kind: input, shape index: {}]
  %s2 = inlined_call_operand.vmem [shape: f32[32,8], index: 2, kind: input, shape index: {}]
  %s3 = inlined_call_operand.vmem [shape: f32[2,8], index: 3, kind: input, shape index: {}]
  %s4 = inlined_call_operand.<no memory space> [shape: f32[1,1], index: 4, kind: input, shape index: {}]
  %s5 = inlined_call_operand.hbm [shape: f32[1,128], index: 5, kind: output, shape index: {}]
  %s6 = sld [smem:[#allocation0]]
  $region30: #{tpu_custom_call.1} parent=0
    _
  %s8 = ssub.s32 1, %s6
  %s9 = scalar_select 0, %s8, %s6
  %10 = sst [smem:[#allocation2]] %s4
  $region1: #{tpu_custom_call.1} parent=0
    #allocation3 [shape = 'u8[512]{0}', space=vmem, size = 0x400, scoped, tag = 'output window, operand 0, single buffered']
    #allocation4 [shape = 's32[1]{0}', space=sflag, size = 0x4, scoped, tag = 'scoped memory for tpu_custom_call.1']
    %11 = vsyncpa [#allocation4], 0
    // Predicated region
    $region2: #{tpu_custom_call.1} parent=1 // pred_check
      _
    $region3: #{tpu_custom_call.1} parent=1 // pred_check_branch
      %13 = sbr.rel (0) target = $region5
    $region4: #{tpu_custom_call.1} parent=1 // pred_region
      _
    $region5: #{tpu_custom_call.1} parent=1 // pred_fallthru
      _
    // Predicated region
    $region6: #{tpu_custom_call.1} parent=1 // pred_check
      _
    $region7: #{tpu_custom_call.1} parent=1 // pred_check_branch
      %15 = sbr.rel (0) target = $region9
    $region8: #{tpu_custom_call.1} parent=1 // pred_region
      _
    $region9: #{tpu_custom_call.1} parent=1 // pred_fallthru
      _
    // Predicated region
    $region10: #{tpu_custom_call.1} parent=1 // pred_check
      _
    $region11: #{tpu_custom_call.1} parent=1 // pred_check_branch
      %17 = sbr.rel (0) target = $region13
    $region12: #{tpu_custom_call.1} parent=1 // pred_region
      _
    $region13: #{tpu_custom_call.1} parent=1 // pred_fallthru
      _
    // Predicated region
    $region14: #{tpu_custom_call.1} parent=1 // pred_check
      _
    $region15: #{tpu_custom_call.1} parent=1 // pred_check_branch
      %19 = sbr.rel (0) target = $region17
    $region16: #{tpu_custom_call.1} parent=1 // pred_region
      _
    $region17: #{tpu_custom_call.1} parent=1 // pred_fallthru
      _
    // Predicated region
    $region18: #{tpu_custom_call.1} parent=1 // pred_check
      _
    $region19: #{tpu_custom_call.1} parent=1 // pred_check_branch
      %21 = sbr.rel (0) target = $region21
    $region20: #{tpu_custom_call.1} parent=1 // pred_region
      _
    $region21: #{tpu_custom_call.1} parent=1 // pred_fallthru
      _
    %v22 = vld [vmem:[%s0] sm:$0xff]
    %v23 = vld [vmem:[%s0 + $0x8] sm:$0xff]
    %v24 = vld [vmem:[%s0 + $0x10] sm:$0xff]
    %v25 = vld [vmem:[%s0 + $0x18] sm:$0xff]
    %v26 = vld [vmem:[%s0 + $0x20] sm:$0xff]
    %v27 = vld [vmem:[%s0 + $0x28] sm:$0xff]
    %v28 = vld [vmem:[%s0 + $0x30] sm:$0xff]
    %v29 = vld [vmem:[%s0 + $0x38] sm:$0xff]
    %v30 = vld [vmem:[%s0 + $0x40] sm:$0xff]
    %v31 = vld [vmem:[%s0 + $0x48] sm:$0xff]
    %v32 = vld [vmem:[%s0 + $0x50] sm:$0xff]
    %v33 = vld [vmem:[%s0 + $0x58] sm:$0xff]
    %v34 = vld [vmem:[%s0 + $0x60] sm:$0xff]
    %v35 = vld [vmem:[%s0 + $0x68] sm:$0xff]
    %v36 = vld [vmem:[%s0 + $0x70] sm:$0xff]
    %v37 = vld [vmem:[%s0 + $0x78] sm:$0xff]
    %v38 = vld [vmem:[%s1] sm:$0xff]
    %v39 = vld [vmem:[%s1 + $0x8] sm:$0xff]
    %v40 = vld [vmem:[%s1 + $0x10] sm:$0xff]
    %v41 = vld [vmem:[%s1 + $0x18] sm:$0xff]
    %v42 = vld [vmem:[%s1 + $0x20] sm:$0xff]
    %v43 = vld [vmem:[%s1 + $0x28] sm:$0xff]
    %v44 = vld [vmem:[%s1 + $0x30] sm:$0xff]
    %v45 = vld [vmem:[%s1 + $0x38] sm:$0xff]
    %v46 = vld [vmem:[%s1 + $0x40] sm:$0xff]
    %v47 = vld [vmem:[%s1 + $0x48] sm:$0xff]
    %v48 = vld [vmem:[%s1 + $0x50] sm:$0xff]
    %v49 = vld [vmem:[%s1 + $0x58] sm:$0xff]
    %v50 = vld [vmem:[%s1 + $0x60] sm:$0xff]
    %v51 = vld [vmem:[%s1 + $0x68] sm:$0xff]
    %v52 = vld [vmem:[%s1 + $0x70] sm:$0xff]
    %v53 = vld [vmem:[%s1 + $0x78] sm:$0xff]
    %v54 = vmul.f32 %v22, %v38
    %v55 = vmul.f32 %v23, %v39
    %v56 = vmul.f32 %v24, %v40
    %v57 = vmul.f32 %v25, %v41
    %v58 = vmul.f32 %v26, %v42
    %v59 = vmul.f32 %v27, %v43
    %v60 = vmul.f32 %v28, %v44
    %v61 = vmul.f32 %v29, %v45
    %v62 = vmul.f32 %v30, %v46
    %v63 = vmul.f32 %v31, %v47
    %v64 = vmul.f32 %v32, %v48
    %v65 = vmul.f32 %v33, %v49
    %v66 = vmul.f32 %v34, %v50
    %v67 = vmul.f32 %v35, %v51
    %v68 = vmul.f32 %v36, %v52
    %v69 = vmul.f32 %v37, %v53
    %v70 = vld [vmem:[%s2] sm:$0xff]
    %v71 = vld [vmem:[%s2 + $0x8] sm:$0xff]
    %v72 = vld [vmem:[%s2 + $0x10] sm:$0xff]
    %v73 = vld [vmem:[%s2 + $0x18] sm:$0xff]
    %v74 = vld [vmem:[%s3] sm:$0x1]
    %v75 = vlaneseq
    %v76 = vshrl.u32 %v75, 7
    %v77 = vsub.s32 0, %v76
    %v78 = vrot.slane %v74, %v77
    %vm79 = vcmask 261120
    %v81 = vsel %vm79, %v54, 0
    %v84 = vsel %vm79, %v55, 0
    %v87 = vsel %vm79, %v56, 0
    %v90 = vsel %vm79, %v57, 0
    %v93 = vsel %vm79, %v58, 0
    %v96 = vsel %vm79, %v59, 0
    %v99 = vsel %vm79, %v60, 0
    %v102 = vsel %vm79, %v61, 0
    %v105 = vsel %vm79, %v62, 0
    %v108 = vsel %vm79, %v63, 0
    %v111 = vsel %vm79, %v64, 0
    %v114 = vsel %vm79, %v65, 0
    %v117 = vsel %vm79, %v66, 0
    %v120 = vsel %vm79, %v67, 0
    %v123 = vsel %vm79, %v68, 0
    %v126 = vsel %vm79, %v69, 0
    %128 = vmatprep.subr.mxu0 0.0
    %129 = vmatpush1.msra.mxu0 %v70
    %130 = vmatprep.subr.mxu0 0.0
    %131 = vmatpush1.msra.mxu0 %v71
    %132 = vmatprep.subr.mxu0 0.0
    %133 = vmatpush1.msra.mxu0 %v72
    %134 = vmatprep.subr.mxu0 0.0
    %135 = vmatpush1.msra.mxu0 %v73
    %136 = vmatprep.subr.mxu0 0.0
    %137 = vmatpush1.msra.mxu0 0.0
    %138 = vmatprep.subr.mxu0 0.0
    %139 = vmatpush1.msra.mxu0 0.0
    %140 = vmatprep.subr.mxu0 0.0
    %141 = vmatpush1.msra.mxu0 0.0
    %142 = vmatprep.subr.mxu0 0.0
    %143 = vmatpush1.msra.mxu0 0.0
    %144 = vmatprep.subr.mxu0 0.0
    %145 = vmatpush1.msra.mxu0 0.0
    %146 = vmatprep.subr.mxu0 0.0
    %147 = vmatpush1.msra.mxu0 0.0
    %148 = vmatprep.subr.mxu0 0.0
    %149 = vmatpush1.msra.mxu0 0.0
    %150 = vmatprep.subr.mxu0 0.0
    %151 = vmatpush1.msra.mxu0 0.0
    %152 = vmatprep.subr.mxu0 0.0
    %153 = vmatpush1.msra.mxu0 0.0
    %154 = vmatprep.subr.mxu0 0.0
    %155 = vmatpush1.msra.mxu0 0.0
    %156 = vmatprep.subr.mxu0 0.0
    %157 = vmatpush1.msra.mxu0 0.0
    %158 = vmatprep.subr.mxu0 0.0
    %159 = vmatpush1.msra.mxu0 0.0
    %160 = vmatprep.subr.mxu0 0.0
    %161 = vmatpush1.msra.mxu0 0.0
    %162 = vmatprep.subr.mxu0 0.0
    %163 = vmatpush1.msra.mxu0 0.0
    %164 = vmatprep.subr.mxu0 0.0
    %165 = vmatpush1.msra.mxu0 0.0
    %166 = vmatprep.subr.mxu0 0.0
    %167 = vmatpush1.msra.mxu0 0.0
    %168 = vmatprep.subr.mxu0 0.0
    %169 = vmatpush1.msra.mxu0 0.0
    %170 = vmatprep.subr.mxu0 0.0
    %171 = vmatpush1.msra.mxu0 0.0
    %172 = vmatprep.subr.mxu0 0.0
    %173 = vmatpush1.msra.mxu0 0.0
    %174 = vmatprep.subr.mxu0 0.0
    %175 = vmatpush1.msra.mxu0 0.0
    %176 = vmatprep.subr.mxu0 0.0
    %177 = vmatpush1.msra.mxu0 0.0
    %178 = vmatprep.subr.mxu0 0.0
    %179 = vmatpush1.msra.mxu0 0.0
    %180 = vmatprep.subr.mxu0 0.0
    %181 = vmatpush1.msra.mxu0 0.0
    %182 = vmatprep.subr.mxu0 0.0
    %183 = vmatpush1.msra.mxu0 0.0
    %184 = vmatprep.subr.mxu0 0.0
    %185 = vmatpush1.msra.mxu0 0.0
    %186 = vmatprep.subr.mxu0 0.0
    %187 = vmatpush1.msra.mxu0 0.0
    %188 = vmatprep.subr.mxu0 0.0
    %189 = vmatpush1.msra.mxu0 0.0
    %190 = vmatprep.subr.mxu0 0.0
    %191 = vmatpush1.msra.mxu0 0.0
    %192 = vmatprep.mubr.f32.mxu0 0.0
    %193 = vmatmul.mubr.f32.gmra.mrb[0].mxu0 %v81
    %v194 = vpop.f32.mrb[0].mxu0
    %v195 = vadd.f32 %v78, %v194
    %v196 = vpop.f32.mrb[0].mxu0
    %197 = vmatprep.mubr.f32.mxu0 0.0
    %198 = vmatmul.mubr.f32.gmra.mrb[0].mxu0 %v84
    %v199 = vpop.f32.mrb[0].mxu0
    %v200 = vadd.f32 %v78, %v199
    %v201 = vpop.f32.mrb[0].mxu0
    %202 = vmatprep.mubr.f32.mxu0 0.0
    %203 = vmatmul.mubr.f32.gmra.mrb[0].mxu0 %v87
    %v204 = vpop.f32.mrb[0].mxu0
    %v205 = vadd.f32 %v78, %v204
    %v206 = vpop.f32.mrb[0].mxu0
    %207 = vmatprep.mubr.f32.mxu0 0.0
    %208 = vmatmul.mubr.f32.gmra.mrb[0].mxu0 %v90
    %v209 = vpop.f32.mrb[0].mxu0
    %v210 = vadd.f32 %v78, %v209
    %v211 = vpop.f32.mrb[0].mxu0
    %212 = vmatprep.mubr.f32.mxu0 0.0
    %213 = vmatmul.mubr.f32.gmra.mrb[0].mxu0 %v93
    %v214 = vpop.f32.mrb[0].mxu0
    %v215 = vadd.f32 %v78, %v214
    %v216 = vpop.f32.mrb[0].mxu0
    %217 = vmatprep.mubr.f32.mxu0 0.0
    %218 = vmatmul.mubr.f32.gmra.mrb[0].mxu0 %v96
    %v219 = vpop.f32.mrb[0].mxu0
    %v220 = vadd.f32 %v78, %v219
    %v221 = vpop.f32.mrb[0].mxu0
    %222 = vmatprep.mubr.f32.mxu0 0.0
    %223 = vmatmul.mubr.f32.gmra.mrb[0].mxu0 %v99
    %v224 = vpop.f32.mrb[0].mxu0
    %v225 = vadd.f32 %v78, %v224
    %v226 = vpop.f32.mrb[0].mxu0
    %227 = vmatprep.mubr.f32.mxu0 0.0
    %228 = vmatmul.mubr.f32.gmra.mrb[0].mxu0 %v102
    %v229 = vpop.f32.mrb[0].mxu0
    %v230 = vadd.f32 %v78, %v229
    %v231 = vpop.f32.mrb[0].mxu0
    %232 = vmatprep.mubr.f32.mxu0 0.0
    %233 = vmatmul.mubr.f32.gmra.mrb[0].mxu0 %v105
    %v234 = vpop.f32.mrb[0].mxu0
    %v235 = vadd.f32 %v78, %v234
    %v236 = vpop.f32.mrb[0].mxu0
    %237 = vmatprep.mubr.f32.mxu0 0.0
    %238 = vmatmul.mubr.f32.gmra.mrb[0].mxu0 %v108
    %v239 = vpop.f32.mrb[0].mxu0
    %v240 = vadd.f32 %v78, %v239
    %v241 = vpop.f32.mrb[0].mxu0
    %242 = vmatprep.mubr.f32.mxu0 0.0
    %243 = vmatmul.mubr.f32.gmra.mrb[0].mxu0 %v111
    %v244 = vpop.f32.mrb[0].mxu0
    %v245 = vadd.f32 %v78, %v244
    %v246 = vpop.f32.mrb[0].mxu0
    %247 = vmatprep.mubr.f32.mxu0 0.0
    %248 = vmatmul.mubr.f32.gmra.mrb[0].mxu0 %v114
    %v249 = vpop.f32.mrb[0].mxu0
    %v250 = vadd.f32 %v78, %v249
    %v251 = vpop.f32.mrb[0].mxu0
    %252 = vmatprep.mubr.f32.mxu0 0.0
    %253 = vmatmul.mubr.f32.gmra.mrb[0].mxu0 %v117
    %v254 = vpop.f32.mrb[0].mxu0
    %v255 = vadd.f32 %v78, %v254
    %v256 = vpop.f32.mrb[0].mxu0
    %257 = vmatprep.mubr.f32.mxu0 0.0
    %258 = vmatmul.mubr.f32.gmra.mrb[0].mxu0 %v120
    %v259 = vpop.f32.mrb[0].mxu0
    %v260 = vadd.f32 %v78, %v259
    %v261 = vpop.f32.mrb[0].mxu0
    %262 = vmatprep.mubr.f32.mxu0 0.0
    %263 = vmatmul.mubr.f32.gmra.mrb[0].mxu0 %v123
    %v264 = vpop.f32.mrb[0].mxu0
    %v265 = vadd.f32 %v78, %v264
    %v266 = vpop.f32.mrb[0].mxu0
    %267 = vmatprep.mubr.f32.mxu0 0.0
    %268 = vmatmul.mubr.f32.gmra.mrb[0].mxu0 %v126
    %v269 = vpop.f32.mrb[0].mxu0
    %v270 = vadd.f32 %v78, %v269
    %v271 = vpop.f32.mrb[0].mxu0
    %272 = vdwg.mxu0
    %v273 = vmax.f32 %v195, 0.0
    %v274 = vmax.f32 %v200, 0.0
    %v275 = vmax.f32 %v205, 0.0
    %v276 = vmax.f32 %v210, 0.0
    %v277 = vmax.f32 %v215, 0.0
    %v278 = vmax.f32 %v220, 0.0
    %v279 = vmax.f32 %v225, 0.0
    %v280 = vmax.f32 %v230, 0.0
    %v281 = vmax.f32 %v235, 0.0
    %v282 = vmax.f32 %v240, 0.0
    %v283 = vmax.f32 %v245, 0.0
    %v284 = vmax.f32 %v250, 0.0
    %v285 = vmax.f32 %v255, 0.0
    %v286 = vmax.f32 %v260, 0.0
    %v287 = vmax.f32 %v265, 0.0
    %v288 = vmax.f32 %v270, 0.0
    %v289 = vld [vmem:[%s3 + $0x1] sm:$0x1]
    %v290 = vlaneseq
    %v291 = vshrl.u32 %v290, 7
    %v292 = vsub.s32 0, %v291
    %v293 = vrot.slane %v289, %v292
    %v294 = vmul.f32 %v273, %v293
    %v295 = vmul.f32 %v274, %v293
    %v296 = vmul.f32 %v275, %v293
    %v297 = vmul.f32 %v276, %v293
    %v298 = vmul.f32 %v277, %v293
    %v299 = vmul.f32 %v278, %v293
    %v300 = vmul.f32 %v279, %v293
    %v301 = vmul.f32 %v280, %v293
    %v302 = vmul.f32 %v281, %v293
    %v303 = vmul.f32 %v282, %v293
    %v304 = vmul.f32 %v283, %v293
    %v305 = vmul.f32 %v284, %v293
    %v306 = vmul.f32 %v285, %v293
    %v307 = vmul.f32 %v286, %v293
    %v308 = vmul.f32 %v287, %v293
    %v309 = vmul.f32 %v288, %v293
    %vm310 = vcmask 64512
    %v311 = vsel %vm310, %v294, 0.0
    %312 = vadd.xlane.f32.xlu0 %v311
    %v313 = vpop.xlane.xlu0 %312
    %v314 = vsel %vm310, %v295, 0.0
    %315 = vadd.xlane.f32.xlu0 %v314
    %v316 = vpop.xlane.xlu0 %315
    %v317 = vsel %vm310, %v296, 0.0
    %318 = vadd.xlane.f32.xlu0 %v317
    %v319 = vpop.xlane.xlu0 %318
    %v320 = vsel %vm310, %v297, 0.0
    %321 = vadd.xlane.f32.xlu0 %v320
    %v322 = vpop.xlane.xlu0 %321
    %v323 = vsel %vm310, %v298, 0.0
    %324 = vadd.xlane.f32.xlu0 %v323
    %v325 = vpop.xlane.xlu0 %324
    %v326 = vsel %vm310, %v299, 0.0
    %327 = vadd.xlane.f32.xlu0 %v326
    %v328 = vpop.xlane.xlu0 %327
    %v329 = vsel %vm310, %v300, 0.0
    %330 = vadd.xlane.f32.xlu0 %v329
    %v331 = vpop.xlane.xlu0 %330
    %v332 = vsel %vm310, %v301, 0.0
    %333 = vadd.xlane.f32.xlu0 %v332
    %v334 = vpop.xlane.xlu0 %333
    %v335 = vsel %vm310, %v302, 0.0
    %336 = vadd.xlane.f32.xlu0 %v335
    %v337 = vpop.xlane.xlu0 %336
    %v338 = vsel %vm310, %v303, 0.0
    %339 = vadd.xlane.f32.xlu0 %v338
    %v340 = vpop.xlane.xlu0 %339
    %v341 = vsel %vm310, %v304, 0.0
    %342 = vadd.xlane.f32.xlu0 %v341
    %v343 = vpop.xlane.xlu0 %342
    %v344 = vsel %vm310, %v305, 0.0
    %345 = vadd.xlane.f32.xlu0 %v344
    %v346 = vpop.xlane.xlu0 %345
    %v347 = vsel %vm310, %v306, 0.0
    %348 = vadd.xlane.f32.xlu0 %v347
    %v349 = vpop.xlane.xlu0 %348
    %v350 = vsel %vm310, %v307, 0.0
    %351 = vadd.xlane.f32.xlu0 %v350
    %v352 = vpop.xlane.xlu0 %351
    %v353 = vsel %vm310, %v308, 0.0
    %354 = vadd.xlane.f32.xlu0 %v353
    %v355 = vpop.xlane.xlu0 %354
    %v356 = vsel %vm310, %v309, 0.0
    %357 = vadd.xlane.f32.xlu0 %v356
    %v358 = vpop.xlane.xlu0 %357
    %s359 = sld [smem:[#allocation2]]
    %v360 = vstv %s359
    %v361 = vadd.f32 %v313, %v360
    %v362 = vadd.f32 %v316, %v360
    %v363 = vadd.f32 %v319, %v360
    %v364 = vadd.f32 %v322, %v360
    %v365 = vadd.f32 %v325, %v360
    %v366 = vadd.f32 %v328, %v360
    %v367 = vadd.f32 %v331, %v360
    %v368 = vadd.f32 %v334, %v360
    %v369 = vadd.f32 %v337, %v360
    %v370 = vadd.f32 %v340, %v360
    %v371 = vadd.f32 %v343, %v360
    %v372 = vadd.f32 %v346, %v360
    %v373 = vadd.f32 %v349, %v360
    %v374 = vadd.f32 %v352, %v360
    %v375 = vadd.f32 %v355, %v360
    %v376 = vadd.f32 %v358, %v360
    %v377 = vxor.u32 %v361, 2147483648
    %v378 = vxor.u32 %v362, 2147483648
    %v379 = vxor.u32 %v363, 2147483648
    %v380 = vxor.u32 %v364, 2147483648
    %v381 = vxor.u32 %v365, 2147483648
    %v382 = vxor.u32 %v366, 2147483648
    %v383 = vxor.u32 %v367, 2147483648
    %v384 = vxor.u32 %v368, 2147483648
    %v385 = vxor.u32 %v369, 2147483648
    %v386 = vxor.u32 %v370, 2147483648
    %v387 = vxor.u32 %v371, 2147483648
    %v388 = vxor.u32 %v372, 2147483648
    %v389 = vxor.u32 %v373, 2147483648
    %v390 = vxor.u32 %v374, 2147483648
    %v391 = vxor.u32 %v375, 2147483648
    %v392 = vxor.u32 %v376, 2147483648
    %v393 = vmul.f32 %v377, 1.442695
    %v394 = vpow.pop %v393
    %v395 = vmul.f32 %v378, 1.442695
    %v396 = vpow.pop %v395
    %v397 = vmul.f32 %v379, 1.442695
    %v398 = vpow.pop %v397
    %v399 = vmul.f32 %v380, 1.442695
    %v400 = vpow.pop %v399
    %v401 = vmul.f32 %v381, 1.442695
    %v402 = vpow.pop %v401
    %v403 = vmul.f32 %v382, 1.442695
    %v404 = vpow.pop %v403
    %v405 = vmul.f32 %v383, 1.442695
    %v406 = vpow.pop %v405
    %v407 = vmul.f32 %v384, 1.442695
    %v408 = vpow.pop %v407
    %v409 = vmul.f32 %v385, 1.442695
    %v410 = vpow.pop %v409
    %v411 = vmul.f32 %v386, 1.442695
    %v412 = vpow.pop %v411
    %v413 = vmul.f32 %v387, 1.442695
    %v414 = vpow.pop %v413
    %v415 = vmul.f32 %v388, 1.442695
    %v416 = vpow.pop %v415
    %v417 = vmul.f32 %v389, 1.442695
    %v418 = vpow.pop %v417
    %v419 = vmul.f32 %v390, 1.442695
    %v420 = vpow.pop %v419
    %v421 = vmul.f32 %v391, 1.442695
    %v422 = vpow.pop %v421
    %v423 = vmul.f32 %v392, 1.442695
    %v424 = vpow.pop %v423
    %v425 = vadd.f32 %v394, 1.0
    %v426 = vadd.f32 %v396, 1.0
    %v427 = vadd.f32 %v398, 1.0
    %v428 = vadd.f32 %v400, 1.0
    %v429 = vadd.f32 %v402, 1.0
    %v430 = vadd.f32 %v404, 1.0
    %v431 = vadd.f32 %v406, 1.0
    %v432 = vadd.f32 %v408, 1.0
    %v433 = vadd.f32 %v410, 1.0
    %v434 = vadd.f32 %v412, 1.0
    %v435 = vadd.f32 %v414, 1.0
    %v436 = vadd.f32 %v416, 1.0
    %v437 = vadd.f32 %v418, 1.0
    %v438 = vadd.f32 %v420, 1.0
    %v439 = vadd.f32 %v422, 1.0
    %v440 = vadd.f32 %v424, 1.0
    %v441 = vrcp.pop %v425
    %v442 = vmul.f32 1.0, %v441
    %v443 = vrcp.pop %v426
    %v444 = vmul.f32 1.0, %v443
    %v445 = vrcp.pop %v427
    %v446 = vmul.f32 1.0, %v445
    %v447 = vrcp.pop %v428
    %v448 = vmul.f32 1.0, %v447
    %v449 = vrcp.pop %v429
    %v450 = vmul.f32 1.0, %v449
    %v451 = vrcp.pop %v430
    %v452 = vmul.f32 1.0, %v451
    %v453 = vrcp.pop %v431
    %v454 = vmul.f32 1.0, %v453
    %v455 = vrcp.pop %v432
    %v456 = vmul.f32 1.0, %v455
    %v457 = vrcp.pop %v433
    %v458 = vmul.f32 1.0, %v457
    %v459 = vrcp.pop %v434
    %v460 = vmul.f32 1.0, %v459
    %v461 = vrcp.pop %v435
    %v462 = vmul.f32 1.0, %v461
    %v463 = vrcp.pop %v436
    %v464 = vmul.f32 1.0, %v463
    %v465 = vrcp.pop %v437
    %v466 = vmul.f32 1.0, %v465
    %v467 = vrcp.pop %v438
    %v468 = vmul.f32 1.0, %v467
    %v469 = vrcp.pop %v439
    %v470 = vmul.f32 1.0, %v469
    %v471 = vrcp.pop %v440
    %v472 = vmul.f32 1.0, %v471
    %v489 = vlaneseq
    %v490 = vand.u32 %v489, 127
    %v491 = vlaneseq
    %v492 = vshrl.u32 %v491, 7
    %v493 = vsub.s32 %v490, %v492
    %v494 = vrot.slane %v442, %v493
    %v495 = vadd.s32 %v490, 4294967288
    %v496 = vlaneseq
    %v497 = vshrl.u32 %v496, 7
    %v498 = vsub.s32 %v495, %v497
    %v499 = vrot.slane %v444, %v498
    %vm500 = vcmask 130112
    %v501 = vsel %vm500, %v499, %v494
    %v502 = vadd.s32 %v490, 4294967280
    %v503 = vlaneseq
    %v504 = vshrl.u32 %v503, 7
    %v505 = vsub.s32 %v502, %v504
    %v506 = vrot.slane %v446, %v505
    %vm507 = vcmask 195712
    %v508 = vsel %vm507, %v506, %v501
    %v509 = vadd.s32 %v490, 4294967272
    %v510 = vlaneseq
    %v511 = vshrl.u32 %v510, 7
    %v512 = vsub.s32 %v509, %v511
    %v513 = vrot.slane %v448, %v512
    %vm514 = vcmask 261312
    %v515 = vsel %vm514, %v513, %v508
    %v516 = vadd.s32 %v490, 4294967264
    %v517 = vlaneseq
    %v518 = vshrl.u32 %v517, 7
    %v519 = vsub.s32 %v516, %v518
    %v520 = vrot.slane %v450, %v519
    %vm521 = vcmask 326912
    %v522 = vsel %vm521, %v520, %v515
    %v523 = vadd.s32 %v490, 4294967256
    %v524 = vlaneseq
    %v525 = vshrl.u32 %v524, 7
    %v526 = vsub.s32 %v523, %v525
    %v527 = vrot.slane %v452, %v526
    %vm528 = vcmask 392512
    %v529 = vsel %vm528, %v527, %v522
    %v530 = vadd.s32 %v490, 4294967248
    %v531 = vlaneseq
    %v532 = vshrl.u32 %v531, 7
    %v533 = vsub.s32 %v530, %v532
    %v534 = vrot.slane %v454, %v533
    %vm535 = vcmask 458112
    %v536 = vsel %vm535, %v534, %v529
    %v537 = vadd.s32 %v490, 4294967240
    %v538 = vlaneseq
    %v539 = vshrl.u32 %v538, 7
    %v540 = vsub.s32 %v537, %v539
    %v541 = vrot.slane %v456, %v540
    %vm542 = vcmask 523712
    %v543 = vsel %vm542, %v541, %v536
    %v544 = vadd.s32 %v490, 4294967232
    %v545 = vlaneseq
    %v546 = vshrl.u32 %v545, 7
    %v547 = vsub.s32 %v544, %v546
    %v548 = vrot.slane %v458, %v547
    %vm549 = vcmask 589312
    %v550 = vsel %vm549, %v548, %v543
    %v551 = vadd.s32 %v490, 4294967224
    %v552 = vlaneseq
    %v553 = vshrl.u32 %v552, 7
    %v554 = vsub.s32 %v551, %v553
    %v555 = vrot.slane %v460, %v554
    %vm556 = vcmask 654912
    %v557 = vsel %vm556, %v555, %v550
    %v558 = vadd.s32 %v490, 4294967216
    %v559 = vlaneseq
    %v560 = vshrl.u32 %v559, 7
    %v561 = vsub.s32 %v558, %v560
    %v562 = vrot.slane %v462, %v561
    %vm563 = vcmask 720512
    %v564 = vsel %vm563, %v562, %v557
    %v565 = vadd.s32 %v490, 4294967208
    %v566 = vlaneseq
    %v567 = vshrl.u32 %v566, 7
    %v568 = vsub.s32 %v565, %v567
    %v569 = vrot.slane %v464, %v568
    %vm570 = vcmask 786112
    %v571 = vsel %vm570, %v569, %v564
    %v572 = vadd.s32 %v490, 4294967200
    %v573 = vlaneseq
    %v574 = vshrl.u32 %v573, 7
    %v575 = vsub.s32 %v572, %v574
    %v576 = vrot.slane %v466, %v575
    %vm577 = vcmask 851712
    %v578 = vsel %vm577, %v576, %v571
    %v579 = vadd.s32 %v490, 4294967192
    %v580 = vlaneseq
    %v581 = vshrl.u32 %v580, 7
    %v582 = vsub.s32 %v579, %v581
    %v583 = vrot.slane %v468, %v582
    %vm584 = vcmask 917312
    %v585 = vsel %vm584, %v583, %v578
    %v586 = vadd.s32 %v490, 4294967184
    %v587 = vlaneseq
    %v588 = vshrl.u32 %v587, 7
    %v589 = vsub.s32 %v586, %v588
    %v590 = vrot.slane %v470, %v589
    %vm591 = vcmask 982912
    %v592 = vsel %vm591, %v590, %v585
    %v593 = vadd.s32 %v490, 4294967176
    %v594 = vlaneseq
    %v595 = vshrl.u32 %v594, 7
    %v596 = vsub.s32 %v593, %v595
    %v597 = vrot.slane %v472, %v596
    %vm598 = vcmask 1048512
    %v599 = vsel %vm598, %v597, %v592
    %601 = vst [vmem:[#allocation3] sm:$0x1] %v599
    // Predicated region
    $region22: #{tpu_custom_call.1} parent=1 // pred_check
      _
    $region23: #{tpu_custom_call.1} parent=1 // pred_check_branch
      %603 = sbr.rel (0) target = $region25
    $region24: #{tpu_custom_call.1} parent=1 // pred_region
      %s605 = ssub.s32 16, 16
      %606 = vsyncadd [#allocation4], %s605
      %s608 = sshll.u32 [#allocation3], 4
      %s609 = int_to_ptr.vmem [resolvable:$true] %s608
      %611 = dma.vmem_to_hbm [thread:$0]  %s609, 16, %s5, [#allocation4]
    $region25: #{tpu_custom_call.1} parent=1 // pred_fallthru
      _
    // Predicated region
    $region26: #{tpu_custom_call.1} parent=1 // pred_check
      _
    $region27: #{tpu_custom_call.1} parent=1 // pred_check_branch
      %613 = sbr.rel (0) target = $region29
    $region28: #{tpu_custom_call.1} parent=1 // pred_region
      %614 = dma.done [#allocation4], 16
    $region29: #{tpu_custom_call.1} parent=1 // pred_fallthru
      _
    %615 = vsyncpa [#allocation4], 1

</llo_original>
